<compile_context>
chip_gen: v7x
topology: tpu7x:2x2x1
jax: 0.10.0
libtpu: 0.0.40
codegen_flags: <defaults>
</compile_context>

<pallas_src>
import jax
import jax.numpy as jnp
from jax.experimental import pallas as pl
from jax.experimental.pallas import tpu as pltpu


def _scalar_mix_kernel(coeff_ref, *refs):
    # coeff_ref: (L,) fp32 in SMEM -- gamma-folded softmax weights.
    # refs[:-1]: L input tiles, each (tile_rows, lane).
    # refs[-1]:  output tile (tile_rows, lane).
    x_refs = refs[:-1]
    o_ref = refs[-1]

    acc = coeff_ref[0] * x_refs[0][...].astype(jnp.float32)
    for l in range(1, len(x_refs)):  # L is small & static -> unrolled VPU FMAs
        acc = acc + coeff_ref[l] * x_refs[l][...].astype(jnp.float32)

    o_ref[...] = acc.astype(o_ref.dtype)


_LANE_CANDIDATES = (1024, 512, 256, 128)


def _sublane_pack(itemsize):
    # f32 -> 8 sublanes, bf16/f16 -> 16, int8/fp8 -> 32 (packed-row tiles).
    return max(8, 32 // int(itemsize))


def _choose_layout(B, S, H):
    """Pick a lane-dense 2D view of the flattened [B*S*H] element stream."""
    N = B * S * H
    divisors = [l for l in _LANE_CANDIDATES if N % l == 0]
    if divisors:
        tall = [l for l in divisors if N // l >= 8]
        lane = max(tall) if tall else min(divisors)
        return N // lane, lane
    # N not a multiple of 128: keep the natural (tokens, H) layout -- a full-H
    # last block dim is always legal (it equals the full array extent).
    return B * S, H


def _vmem_capacity_bytes():
    try:
        return int(pltpu.get_tpu_info().vmem_capacity_bytes)
    except Exception:
        return 64 << 20  # conservative fallback: v7x physical VMEM per TC


def _choose_tile_rows(rows_total, lane, bytes_per_row_all_streams, pack,
                      vmem_budget_bytes, itemsize):
    if rows_total <= pack:
        return rows_total  # single full-extent block (always a legal shape)
    # Double-buffered footprint of all (L inputs + output) streams per row.
    budget_rows = vmem_budget_bytes // (2 * bytes_per_row_all_streams)
    # >~4 MiB per block buys no further DMA efficiency; more (even) grid steps
    # also load-balance the "parallel" axis across v7x's two TensorCores.
    cap_rows = max(pack, (4 << 20) // (lane * itemsize))
    # Guarantee >= 2 grid steps so megacore sharding has work to split.
    half_rows = (((rows_total + 1) // 2 + pack - 1) // pack) * pack
    tile = min(budget_rows, cap_rows, half_rows, rows_total)
    return max(pack, (tile // pack) * pack)


def scalar_mix(tensors, weights, gamma, *, out_dtype=None,
               vmem_budget_bytes=None):
    """tensors: list of L arrays [B, S, H] (same shape/dtype; bf16 welcome,
    accumulation stays fp32 in vregs).  weights: [L] raw mixing weights
    (softmax applied here, once).  gamma: [1] scale."""
    L = len(tensors)
    B, S, H = tensors[0].shape
    in_dtype = tensors[0].dtype
    out_dtype = jnp.dtype(in_dtype if out_dtype is None else out_dtype)
    N = B * S * H

    rows_total, lane = _choose_layout(B, S, H)
    # Free, contiguous reshapes -- no HBM copy (no jnp.stack).
    flat = [t.reshape(rows_total, lane) for t in tensors]

    # Fold gamma into the softmax'd weights once (O(L), negligible).
    g = jnp.reshape(gamma, (-1,))[0].astype(jnp.float32)
    coeffs = g * jax.nn.softmax(weights.astype(jnp.float32), axis=0)  # (L,)

    in_item = jnp.dtype(in_dtype).itemsize
    out_item = jnp.dtype(out_dtype).itemsize
    pack = _sublane_pack(min(in_item, out_item))

    vmem_cap = _vmem_capacity_bytes()
    if vmem_budget_bytes is None:
        # Generation-aware: leave headroom for Mosaic scratch / semaphores.
        vmem_budget_bytes = max(8 << 20, min(vmem_cap - (16 << 20),
                                             (vmem_cap * 3) // 4))

    bytes_per_row = (L * in_item + out_item) * lane
    tile_rows = _choose_tile_rows(rows_total, lane, bytes_per_row, pack,
                                  vmem_budget_bytes, max(in_item, out_item))

    per_step_bytes = 2 * tile_rows * bytes_per_row  # double-buffered streams
    vmem_limit = per_step_bytes + max(per_step_bytes // 4, 2 << 20)
    vmem_limit = max(vmem_limit, 8 << 20)
    # Never request more than physical VMEM (v7x has only 64 MiB).
    vmem_limit = int(min(vmem_limit,
                         max(vmem_cap - (4 << 20), per_step_bytes + (1 << 20))))

    # Ragged last tile is fine: the op is elementwise and out-of-bounds lanes
    # of the padded final block are never stored.
    grid = (pl.cdiv(rows_total, tile_rows),)

    cost = pl.CostEstimate(
        flops=2 * L * N,
        transcendentals=0,
        bytes_accessed=L * N * in_item + N * out_item,
    )

    out = pl.pallas_call(
        _scalar_mix_kernel,
        out_shape=jax.ShapeDtypeStruct((rows_total, lane), out_dtype),
        grid_spec=pltpu.PrefetchScalarGridSpec(
            num_scalar_prefetch=0,
            grid=grid,
            in_specs=(
                # gamma-folded weights live in SMEM (scalar reads, no vreg pad)
                [pl.BlockSpec(memory_space=pltpu.MemorySpace.SMEM)]
                # one lane-dense (tile_rows, lane) block per layer tensor
                + [pl.BlockSpec((tile_rows, lane), lambda i: (i, 0))
                   for _ in range(L)]
            ),
            out_specs=pl.BlockSpec((tile_rows, lane), lambda i: (i, 0)),
        ),
        compiler_params=pltpu.CompilerParams(
            dimension_semantics=("parallel",),   # megacore-shard the row axis
            vmem_limit_bytes=vmem_limit,
        ),
        cost_estimate=cost,
    )(coeffs, *flat)

    # TODO(synk): for very large L on v7x (where 2*(L+1) resident blocks would
    # force sub-MiB tiles), add a manual-DMA path keeping inputs in
    # memory_space=pl.ANY and double-buffering one layer block at a time into
    # an fp32 VMEM accumulator, decoupling the VMEM footprint from L.

    return out.reshape(B, S, H)


def _reference(tensors, weights, gamma):
    nw = jax.nn.softmax(weights.astype(jnp.float32), axis=0)
    ws = sum(w * h.astype(jnp.float32) for w, h in zip(nw, tensors))
    return gamma.astype(jnp.float32)[0] * ws


if __name__ == "__main__":
    root = jax.random.PRNGKey(0)

    def run_case(n_layers, B, S, H, zero_weights=True):
        case_key = jax.random.fold_in(root, n_layers * 100000 + B * 10000
                                      + S * 100 + H)
        if zero_weights:
            # Exactly as in ScalarMix.__init__: weights=zeros, gamma=[1.0].
            weights = jnp.zeros((n_layers,), dtype=jnp.float32)
            gamma = jnp.array([1.0], dtype=jnp.float32)
        else:
            wkey, gkey = jax.random.split(jax.random.fold_in(case_key, 7))
            weights = 0.5 * jax.random.normal(wkey, (n_layers,), jnp.float32)
            gamma = 1.0 + 0.1 * jax.random.normal(gkey, (1,), jnp.float32)

        keys = jax.random.split(case_key, n_layers)
        tensors = [jax.random.normal(k, (B, S, H), dtype=jnp.float32)
                   for k in keys]

        out = jax.block_until_ready(scalar_mix(tensors, weights, gamma))
        ref = _reference(tensors, weights, gamma)
        assert out.shape == (B, S, H)
        err = float(jnp.max(jnp.abs(out.astype(jnp.float32) - ref)))
        assert err < 1e-4, f"case {(n_layers, B, S, H)} max err {err}"

    # Primary case matching the module spec (n_layers=4, hidden=32).
    run_case(4, 2, 8, 32, zero_weights=True)
    # Lane-dense retiling path with a ragged last row-tile (N % 128 == 0).
    run_case(4, 2, 48, 64, zero_weights=False)
    # (tokens, H) fallback path (N % 128 != 0) with a ragged last row-tile.
    run_case(3, 3, 5, 20, zero_weights=False)

    print("KERNEL_OK")
</pallas_src>

<mosaic_0001>
module attributes {stable_mosaic.version = 11 : i64} {
  func.func @_scalar_mix_kernel(%arg0: i32, %arg1: memref<4xf32, #tpu.memory_space<smem>>, %arg2: memref<4x128xf32, #tpu.memory_space<vmem>>, %arg3: memref<4x128xf32, #tpu.memory_space<vmem>>, %arg4: memref<4x128xf32, #tpu.memory_space<vmem>>, %arg5: memref<4x128xf32, #tpu.memory_space<vmem>>, %arg6: memref<4x128xf32, #tpu.memory_space<vmem>>) attributes {dimension_semantics = [#tpu.dimension_semantics<parallel>], iteration_bounds = array<i64: 1>, scalar_prefetch = 0 : i64, scratch_operands = 0 : i64, tpu.core_type = #tpu.core_type<tc>, window_params = [{transform_indices = @transform_0, window_bounds = array<i64: 4>}, {transform_indices = @transform_1, window_bounds = array<i64: 4, 128>}, {transform_indices = @transform_2, window_bounds = array<i64: 4, 128>}, {transform_indices = @transform_3, window_bounds = array<i64: 4, 128>}, {transform_indices = @transform_4, window_bounds = array<i64: 4, 128>}, {transform_indices = @transform_5, window_bounds = array<i64: 4, 128>}]} {
    %c0 = arith.constant 0 : index
    %0 = memref.load %arg1[%c0] : memref<4xf32, #tpu.memory_space<smem>>
    %c0_0 = arith.constant 0 : index
    %c0_1 = arith.constant 0 : index
    %1 = vector.load %arg2[%c0_0, %c0_1] : memref<4x128xf32, #tpu.memory_space<vmem>>, vector<4x128xf32>
    %2 = vector.broadcast %0 : f32 to vector<4x128xf32>
    %3 = arith.mulf %2, %1 : vector<4x128xf32>
    %c1 = arith.constant 1 : index
    %4 = memref.load %arg1[%c1] : memref<4xf32, #tpu.memory_space<smem>>
    %c0_2 = arith.constant 0 : index
    %c0_3 = arith.constant 0 : index
    %5 = vector.load %arg3[%c0_2, %c0_3] : memref<4x128xf32, #tpu.memory_space<vmem>>, vector<4x128xf32>
    %6 = vector.broadcast %4 : f32 to vector<4x128xf32>
    %7 = arith.mulf %6, %5 : vector<4x128xf32>
    %8 = arith.addf %3, %7 : vector<4x128xf32>
    %c2 = arith.constant 2 : index
    %9 = memref.load %arg1[%c2] : memref<4xf32, #tpu.memory_space<smem>>
    %c0_4 = arith.constant 0 : index
    %c0_5 = arith.constant 0 : index
    %10 = vector.load %arg4[%c0_4, %c0_5] : memref<4x128xf32, #tpu.memory_space<vmem>>, vector<4x128xf32>
    %11 = vector.broadcast %9 : f32 to vector<4x128xf32>
    %12 = arith.mulf %11, %10 : vector<4x128xf32>
    %13 = arith.addf %8, %12 : vector<4x128xf32>
    %c3 = arith.constant 3 : index
    %14 = memref.load %arg1[%c3] : memref<4xf32, #tpu.memory_space<smem>>
    %c0_6 = arith.constant 0 : index
    %c0_7 = arith.constant 0 : index
    %15 = vector.load %arg5[%c0_6, %c0_7] : memref<4x128xf32, #tpu.memory_space<vmem>>, vector<4x128xf32>
    %16 = vector.broadcast %14 : f32 to vector<4x128xf32>
    %17 = arith.mulf %16, %15 : vector<4x128xf32>
    %18 = arith.addf %13, %17 : vector<4x128xf32>
    %c0_8 = arith.constant 0 : index
    %c0_9 = arith.constant 0 : index
    %19 = vector.load %arg6[%c0_8, %c0_9] : memref<4x128xf32, #tpu.memory_space<vmem>>, vector<4x128xf32>
    tpu.vector_store %arg6[%c0_8, %c0_9], %18 {strides = array<i32>} : memref<4x128xf32, #tpu.memory_space<vmem>>, vector<4x128xf32>,
    return
  }
  func.func @transform_0(%arg0: i32) -> i32 {
    %c0_i32 = arith.constant 0 : i32
    %c0_i32_0 = arith.constant 0 : i32
    return %c0_i32 : i32
  }
  func.func @transform_1(%arg0: i32) -> (i32, i32) {
    %c0_i32 = arith.constant 0 : i32
    %c0_i32_0 = arith.constant 0 : i32
    return %arg0, %c0_i32 : i32, i32
  }
  func.func @transform_2(%arg0: i32) -> (i32, i32) {
    %c0_i32 = arith.constant 0 : i32
    %c0_i32_0 = arith.constant 0 : i32
    return %arg0, %c0_i32 : i32, i32
  }
  func.func @transform_3(%arg0: i32) -> (i32, i32) {
    %c0_i32 = arith.constant 0 : i32
    %c0_i32_0 = arith.constant 0 : i32
    return %arg0, %c0_i32 : i32, i32
  }
  func.func @transform_4(%arg0: i32) -> (i32, i32) {
    %c0_i32 = arith.constant 0 : i32
    %c0_i32_0 = arith.constant 0 : i32
    return %arg0, %c0_i32 : i32, i32
  }
  func.func @transform_5(%arg0: i32) -> (i32, i32) {
    %c0_i32 = arith.constant 0 : i32
    %c0_i32_0 = arith.constant 0 : i32
    return %arg0, %c0_i32 : i32, i32
  }
}

</mosaic_0001>

<llo_original>
// kernel: tpu_custom_call.1
$region0: #{tpu_custom_call.1}
  #allocation0 [shape = 'u32[]', space=smem, size = 0x4, offset = 0x4, fixed_abs, tag = 'smem constant byte address 0x4 - core index']
  #allocation1 [shape = 'u32[144,128]{1,0:T(1,128)}', space=vmem, size = 0x12000, scoped, tag = 'internal scratch']
  %s0 = inlined_call_operand.hbm [shape: f32[4], index: 0, kind: input, shape index: {}]
  %s1 = inlined_call_operand.hbm [shape: f32[4,128], index: 1, kind: input, shape index: {}]
  %s2 = inlined_call_operand.vmem [shape: f32[4,128], index: 2, kind: input, shape index: {}]
  %s3 = inlined_call_operand.vmem [shape: f32[4,128], index: 3, kind: input, shape index: {}]
  %s4 = inlined_call_operand.vmem [shape: f32[4,128], index: 4, kind: input, shape index: {}]
  %s5 = inlined_call_operand.hbm [shape: f32[4,128], index: 5, kind: output, shape index: {}]
  %s6 = sld [smem:[#allocation0]]
  $region38: #{tpu_custom_call.1} parent=0
    _
  %s8 = ssub.s32 1, %s6
  %s9 = scalar_select 0, %s8, %s6
  $region1: #{tpu_custom_call.1} parent=0
    #allocation2 [shape = 'u8[512]{0}', space=smem, size = 0x200, scoped, tag = 'input window, operand 0, single buffered']
    #allocation3 [shape = 's32[1]{0}', space=sflag, size = 0x4, scoped, tag = 'scoped memory for tpu_custom_call.1']
    #allocation4 [shape = 's32[1]{0}', space=sflag, size = 0x4, scoped, tag = 'scoped memory for tpu_custom_call.1']
    #allocation5 [shape = 's32[1]{0}', space=sflag, size = 0x4, scoped, tag = 'scoped memory for tpu_custom_call.1']
    #allocation6 [shape = 'u8[2048]{0}', space=vmem, size = 0x800, scoped, tag = 'input window, operand 1, single buffered']
    #allocation7 [shape = 'u8[2048]{0}', space=vmem, size = 0x800, scoped, tag = 'output window, operand 0, single buffered']
    %10 = vsyncpa [#allocation5], 0
    %11 = vsyncpa [#allocation3], 0
    %12 = vsyncpa [#allocation4], 0
    // Predicated region
    $region2: #{tpu_custom_call.1} parent=1 // pred_check
      _
    $region3: #{tpu_custom_call.1} parent=1 // pred_check_branch
      %14 = sbr.rel (0) target = $region5
    $region4: #{tpu_custom_call.1} parent=1 // pred_region
      %s16 = ssub.s32 16, 16
      %17 = vsyncadd [#allocation5], %s16
      %20 = dma.hbm_to_smem %s0, 16, [#allocation2], [#allocation5]
    $region5: #{tpu_custom_call.1} parent=1 // pred_fallthru
      _
    // Predicated region
    $region6: #{tpu_custom_call.1} parent=1 // pred_check
      _
    $region7: #{tpu_custom_call.1} parent=1 // pred_check_branch
      %22 = sbr.rel (0) target = $region9
    $region8: #{tpu_custom_call.1} parent=1 // pred_region
      %s24 = ssub.s32 64, 64
      %25 = vsyncadd [#allocation3], %s24
      %s27 = sshll.u32 [#allocation6], 4
      %s28 = int_to_ptr.vmem [resolvable:$true] %s27
      %30 = dma.hbm_to_vmem [thread:$0]  %s1, 64, %s28, [#allocation3]
    $region9: #{tpu_custom_call.1} parent=1 // pred_fallthru
      _
    // Predicated region
    $region10: #{tpu_custom_call.1} parent=1 // pred_check
      _
    $region11: #{tpu_custom_call.1} parent=1 // pred_check_branch
      %32 = sbr.rel (0) target = $region13
    $region12: #{tpu_custom_call.1} parent=1 // pred_region
      _
    $region13: #{tpu_custom_call.1} parent=1 // pred_fallthru
      _
    // Predicated region
    $region14: #{tpu_custom_call.1} parent=1 // pred_check
      _
    $region15: #{tpu_custom_call.1} parent=1 // pred_check_branch
      %34 = sbr.rel (0) target = $region17
    $region16: #{tpu_custom_call.1} parent=1 // pred_region
      _
    $region17: #{tpu_custom_call.1} parent=1 // pred_fallthru
      _
    // Predicated region
    $region18: #{tpu_custom_call.1} parent=1 // pred_check
      _
    $region19: #{tpu_custom_call.1} parent=1 // pred_check_branch
      %36 = sbr.rel (0) target = $region21
    $region20: #{tpu_custom_call.1} parent=1 // pred_region
      _
    $region21: #{tpu_custom_call.1} parent=1 // pred_fallthru
      _
    // Predicated region
    $region22: #{tpu_custom_call.1} parent=1 // pred_check
      _
    $region23: #{tpu_custom_call.1} parent=1 // pred_check_branch
      %38 = sbr.rel (0) target = $region25
    $region24: #{tpu_custom_call.1} parent=1 // pred_region
      %39 = dma.done [#allocation5], 16
    $region25: #{tpu_custom_call.1} parent=1 // pred_fallthru
      _
    // Predicated region
    $region26: #{tpu_custom_call.1} parent=1 // pred_check
      _
    $region27: #{tpu_custom_call.1} parent=1 // pred_check_branch
      %41 = sbr.rel (0) target = $region29
    $region28: #{tpu_custom_call.1} parent=1 // pred_region
      %42 = dma.done [#allocation3], 64
    $region29: #{tpu_custom_call.1} parent=1 // pred_fallthru
      _
    %43 = sfence
    %s44 = sld [smem:[#allocation2]]
    %v45 = vld [vmem:[#allocation6] sm:$0xf]
    %v46 = vstv %s44
    %v47 = vmul.f32 %v46, %v45
    %s48 = sld [smem:[#allocation2 + $0x1]]
    %v49 = vld [vmem:[%s2] sm:$0xf]
    %v50 = vstv %s48
    %v51 = vmul.f32 %v50, %v49
    %v52 = vadd.f32 %v47, %v51
    %s53 = sld [smem:[#allocation2 + $0x2]]
    %v54 = vld [vmem:[%s3] sm:$0xf]
    %v55 = vstv %s53
    %v56 = vmul.f32 %v55, %v54
    %v57 = vadd.f32 %v52, %v56
    %s58 = sld [smem:[#allocation2 + $0x3]]
    %v59 = vld [vmem:[%s4] sm:$0xf]
    %v60 = vstv %s58
    %v61 = vmul.f32 %v60, %v59
    %v62 = vadd.f32 %v57, %v61
    %63 = vst [vmem:[#allocation7] sm:$0xf] %v62
    // Predicated region
    $region30: #{tpu_custom_call.1} parent=1 // pred_check
      _
    $region31: #{tpu_custom_call.1} parent=1 // pred_check_branch
      %65 = sbr.rel (0) target = $region33
    $region32: #{tpu_custom_call.1} parent=1 // pred_region
      %s67 = ssub.s32 64, 64
      %68 = vsyncadd [#allocation4], %s67
      %s70 = sshll.u32 [#allocation7], 4
      %s71 = int_to_ptr.vmem [resolvable:$true] %s70
      %73 = dma.vmem_to_hbm [thread:$0]  %s71, 64, %s5, [#allocation4]
    $region33: #{tpu_custom_call.1} parent=1 // pred_fallthru
      _
    // Predicated region
    $region34: #{tpu_custom_call.1} parent=1 // pred_check
      _
    $region35: #{tpu_custom_call.1} parent=1 // pred_check_branch
      %75 = sbr.rel (0) target = $region37
    $region36: #{tpu_custom_call.1} parent=1 // pred_region
      %76 = dma.done [#allocation4], 64
    $region37: #{tpu_custom_call.1} parent=1 // pred_fallthru
      _
    %77 = vsyncpa [#allocation3], 1
    %78 = vsyncpa [#allocation4], 1
    %79 = vsyncpa [#allocation5], 1

</llo_original>
